<compile_context>
chip_gen: v5e
topology: v5e:2x2
jax: 0.10.0
libtpu: 0.0.40
codegen_flags: <defaults>
</compile_context>

<pallas_src>
import functools

import jax
import jax.numpy as jnp
from jax.experimental import pallas as pl
from jax.experimental.pallas import tpu as pltpu


def _conv_matmul_tanh_kernel(p_ref, w_ref, b_ref, o_ref):
    """One (image, spatial-tile) block of tanh(W @ patches + b).

    p_ref : [K, TM]  bf16  im2col patches (K on sublanes, TM on lanes)
    w_ref : [O, K]   bf16  flattened conv weight
    b_ref : [O, 1]   f32   bias column
    o_ref : [O, TM]  f32   lane-dense output tile
    """
    acc = jnp.dot(w_ref[...], p_ref[...], preferred_element_type=jnp.float32)
    o_ref[...] = jnp.tanh(acc + b_ref[...]).astype(o_ref.dtype)


def _round_up(x, m):
    return ((x + m - 1) // m) * m


def _im2col_nkm(x, kernel_size, stride, padding, ohow_pad):
    """x: [N,C,H,W] -> patches [N, C*KH*KW, ohow_pad] (plain-JAX glue)."""
    kh, kw = kernel_size
    sh, sw = stride
    ph, pw = padding
    n, c, h, w = x.shape
    oh = (h + 2 * ph - kh) // sh + 1
    ow = (w + 2 * pw - kw) // sw + 1
    xp = jnp.pad(x, ((0, 0), (0, 0), (ph, ph), (pw, pw)))
    cols = []
    for i in range(kh):
        for j in range(kw):
            cols.append(xp[:, :, i:i + (oh - 1) * sh + 1:sh,
                              j:j + (ow - 1) * sw + 1:sw])        # [N,C,OH,OW]
    # [N, C, KH*KW, OH, OW] -> [N, C*KH*KW, OH*OW]; the (c, i, j) flattening
    # order matches PyTorch's weight.view(O, C*KH*KW).
    patches = jnp.stack(cols, axis=2).reshape(n, c * kh * kw, oh * ow)
    patches = jnp.pad(patches, ((0, 0), (0, 0), (0, ohow_pad - oh * ow)))
    return patches


@functools.partial(jax.jit, static_argnames=("kernel_size", "stride", "padding"))
def conv2d_tanh(x, weight, bias, *, kernel_size, stride=(1, 1), padding=(0, 0)):
    """
    Args:
        x:      [N, C, H, W]   float32
        weight: [O, C, KH, KW] float32
        bias:   [O]            float32
    Returns:
        [N, O, OH, OW] float32  == tanh(conv2d(x, weight, bias))
    """
    n, c, h, w = x.shape
    o, _, kh, kw = weight.shape
    sh, sw = stride
    ph, pw = padding
    oh = (h + 2 * ph - kh) // sh + 1
    ow = (w + 2 * pw - kw) // sw + 1
    ohow = oh * ow
    k = c * kh * kw

    # Spatial (lane-axis) tile: always a multiple of 128 so the grid is an
    # exact division, the output stores are full-lane, and there is never a
    # "whole array as one block" fallback. K and O are tiny, so even a
    # 2048-wide block set is only a few hundred KiB of VMEM (double-buffered),
    # safe on v5e (16 MiB scoped), v6e (32 MiB) and v7x (32/64 MiB).
    if ohow <= 4096:
        ohow_pad = _round_up(ohow, 128)
        tm = ohow_pad                      # single spatial tile per image
    else:
        tm = 2048                          # large tile: amortize per-step cost
        ohow_pad = _round_up(ohow, tm)
    grid = (n, ohow_pad // tm)

    # bf16 MXU operands (halves HBM traffic of the dominant patches array);
    # accumulation / bias / tanh remain f32 inside the kernel.
    patches = _im2col_nkm(x.astype(jnp.bfloat16), kernel_size, stride,
                          padding, ohow_pad)                     # [N, K, Mp]
    w_mat = weight.reshape(o, k).astype(jnp.bfloat16)            # [O, K]
    b_mat = bias.astype(jnp.float32).reshape(o, 1)               # [O, 1]

    out3 = pl.pallas_call(
        _conv_matmul_tanh_kernel,
        out_shape=jax.ShapeDtypeStruct((n, o, ohow_pad), jnp.float32),
        grid=grid,
        in_specs=[
            pl.BlockSpec((None, k, tm), lambda ni, mi: (ni, 0, mi)),  # patches
            pl.BlockSpec((o, k), lambda ni, mi: (0, 0)),              # weight
            pl.BlockSpec((o, 1), lambda ni, mi: (0, 0)),              # bias
        ],
        out_specs=pl.BlockSpec((None, o, tm), lambda ni, mi: (ni, 0, mi)),
        compiler_params=pltpu.CompilerParams(
            dimension_semantics=("parallel", "parallel")),
    )(patches, w_mat, b_mat)

    # [N, O, OH*OW (padded)] -> crop padding -> [N, O, OH, OW].
    # Pure slice + reshape: no post-kernel transpose.
    out = out3[:, :, :ohow].reshape(n, o, oh, ow)
    return out.astype(x.dtype)


def _init_params(key, in_channels, out_channels, kernel_size):
    """Deterministic PyTorch-style (uniform +-1/sqrt(fan_in)) init."""
    kh, kw = kernel_size
    fan_in = in_channels * kh * kw
    bound = 1.0 / jnp.sqrt(fan_in)
    kw_key, kb_key = jax.random.split(key)
    weight = jax.random.uniform(
        kw_key, (out_channels, in_channels, kh, kw),
        minval=-bound, maxval=bound, dtype=jnp.float32)
    bias = jax.random.uniform(
        kb_key, (out_channels,), minval=-bound, maxval=bound,
        dtype=jnp.float32)
    return weight, bias


if __name__ == "__main__":
    # Module config: Conv2dTanh(in_channels=4, out_channels=8, kernel_size=(3,3),
    #                           stride=(1,1), padding=(1,1), bias=True)
    in_channels, out_channels = 4, 8
    kernel_size, stride, padding = (3, 3), (1, 1), (1, 1)
    N, H, W = 2, 16, 16

    key = jax.random.PRNGKey(0)
    kx, kp = jax.random.split(key)
    x = jax.random.normal(kx, (N, in_channels, H, W), dtype=jnp.float32)
    weight, bias = _init_params(kp, in_channels, out_channels, kernel_size)

    out = conv2d_tanh(x, weight, bias, kernel_size=kernel_size,
                      stride=stride, padding=padding)
    out = jax.block_until_ready(out)

    # Reference: XLA conv on the SAME bf16-cast operands with f32 accumulation
    # (identical numerics to the kernel's MXU path; bias + tanh in f32).
    ref = jax.lax.conv_general_dilated(
        x.astype(jnp.bfloat16), weight.astype(jnp.bfloat16),
        window_strides=stride,
        padding=[(padding[0], padding[0]), (padding[1], padding[1])],
        dimension_numbers=("NCHW", "OIHW", "NCHW"),
        preferred_element_type=jnp.float32)
    ref = jnp.tanh(ref + bias.reshape(1, -1, 1, 1))

    assert out.shape == (N, out_channels, H, W), out.shape
    assert jnp.allclose(out, ref, atol=1e-3, rtol=1e-3), "mismatch vs reference"

    print("KERNEL_OK")
</pallas_src>

<mosaic_0001>
module attributes {stable_mosaic.version = 11 : i64} {
  func.func @_conv_matmul_tanh_kernel(%arg0: i32, %arg1: i32, %arg2: memref<1x36x256xbf16, #tpu.memory_space<vmem>>, %arg3: memref<8x36xbf16, #tpu.memory_space<vmem>>, %arg4: memref<8x1xf32, #tpu.memory_space<vmem>>, %arg5: memref<1x8x256xf32, #tpu.memory_space<vmem>>) attributes {dimension_semantics = [#tpu.dimension_semantics<parallel>, #tpu.dimension_semantics<parallel>], iteration_bounds = array<i64: 2, 1>, scalar_prefetch = 0 : i64, scratch_operands = 0 : i64, tpu.core_type = #tpu.core_type<tc>, window_params = [{transform_indices = @transform_0, window_bounds = array<i64: 1, 36, 256>}, {pipeline_mode = #tpu.pipeline_mode<synchronous>, transform_indices = @transform_1, window_bounds = array<i64: 8, 36>}, {pipeline_mode = #tpu.pipeline_mode<synchronous>, transform_indices = @transform_2, window_bounds = array<i64: 8, 1>}, {transform_indices = @transform_3, window_bounds = array<i64: 1, 8, 256>}]} {
    %c0 = arith.constant 0 : index
    %c0_0 = arith.constant 0 : index
    %0 = vector.load %arg3[%c0, %c0_0] : memref<8x36xbf16, #tpu.memory_space<vmem>>, vector<8x36xbf16>
    %c0_1 = arith.constant 0 : index
    %c0_2 = arith.constant 0 : index
    %c0_3 = arith.constant 0 : index
    %1 = vector.load %arg2[%c0_1, %c0_2, %c0_3] : memref<1x36x256xbf16, #tpu.memory_space<vmem>>, vector<1x36x256xbf16>
    %2 = vector.shape_cast %1 : vector<1x36x256xbf16> to vector<36x256xbf16>
    %cst = arith.constant dense<0.000000e+00> : vector<8x256xf32>
    %3 = tpu.matmul %0, %2, %cst {dimension_numbers = #tpu.dot_dimension_numbers<[1], [0], [0], [1], [0, 0, 1, 1], [], []>} : vector<8x36xbf16>, vector<36x256xbf16>, vector<8x256xf32> -> vector<8x256xf32>
    %c0_4 = arith.constant 0 : index
    %c0_5 = arith.constant 0 : index
    %4 = vector.load %arg4[%c0_4, %c0_5] : memref<8x1xf32, #tpu.memory_space<vmem>>, vector<8x1xf32>
    %5 = vector.broadcast %4 : vector<8x1xf32> to vector<8x256xf32>
    %6 = arith.addf %3, %5 : vector<8x256xf32>
    %7 = math.tanh %6 : vector<8x256xf32>
    %c0_6 = arith.constant 0 : index
    %c0_7 = arith.constant 0 : index
    %c0_8 = arith.constant 0 : index
    %8 = vector.load %arg5[%c0_6, %c0_7, %c0_8] : memref<1x8x256xf32, #tpu.memory_space<vmem>>, vector<1x8x256xf32>
    %9 = vector.shape_cast %8 : vector<1x8x256xf32> to vector<8x256xf32>
    %10 = vector.shape_cast %7 : vector<8x256xf32> to vector<1x8x256xf32>
    tpu.vector_store %arg5[%c0_6, %c0_7, %c0_8], %10 {strides = array<i32>} : memref<1x8x256xf32, #tpu.memory_space<vmem>>, vector<1x8x256xf32>,
    return
  }
  func.func @transform_0(%arg0: i32, %arg1: i32) -> (i32, i32, i32) {
    %c0_i32 = arith.constant 0 : i32
    %c0_i32_0 = arith.constant 0 : i32
    return %arg0, %c0_i32, %arg1 : i32, i32, i32
  }
  func.func @transform_1(%arg0: i32, %arg1: i32) -> (i32, i32) {
    %c0_i32 = arith.constant 0 : i32
    %c0_i32_0 = arith.constant 0 : i32
    %c0_i32_1 = arith.constant 0 : i32
    return %c0_i32, %c0_i32_0 : i32, i32
  }
  func.func @transform_2(%arg0: i32, %arg1: i32) -> (i32, i32) {
    %c0_i32 = arith.constant 0 : i32
    %c0_i32_0 = arith.constant 0 : i32
    %c0_i32_1 = arith.constant 0 : i32
    return %c0_i32, %c0_i32_0 : i32, i32
  }
  func.func @transform_3(%arg0: i32, %arg1: i32) -> (i32, i32, i32) {
    %c0_i32 = arith.constant 0 : i32
    %c0_i32_0 = arith.constant 0 : i32
    return %arg0, %c0_i32, %arg1 : i32, i32, i32
  }
}

</mosaic_0001>

<llo_original>
// kernel: conv2d_tanh.1
$region0: #{conv2d_tanh.1}
  #allocation0 [shape = 'u32[]', space=smem, size = 0x4, offset = 0x4, fixed_abs, tag = 'smem constant byte address 0x4 - core index']
  #allocation1 [shape = 'u32[72,128]{1,0:T(1,128)}', space=vmem, size = 0x9000, scoped, tag = 'internal scratch']
  %s0 = inlined_call_operand.vmem [shape: bf16[2,36,256], index: 0, kind: input, shape index: {}]
  %s1 = inlined_call_operand.vmem [shape: bf16[8,36], index: 1, kind: input, shape index: {}]
  %s2 = inlined_call_operand.vmem [shape: f32[8,1], index: 2, kind: input, shape index: {}]
  %s3 = inlined_call_operand.vmem [shape: f32[2,8,256], index: 3, kind: output, shape index: {}]
  %s4 = sld [smem:[#allocation0]]
  $region45: #{conv2d_tanh.1} parent=0
    _
  %s6 = ssub.s32 1, %s4
  %s7 = scalar_select 0, %s6, %s4
  loop: start=0, step=1, limit=4
  $region2: #{conv2d_tanh.1} parent=0 // loop_pre_header
    _
  $region3: #{conv2d_tanh.1} parent=0 // loop_header
    %s9 = sphi 0, %s13
    %p10 = scmp.ge.s32.totalorder %s9, 4
    %s16 = sphi 0, %s28
    %s17 = sphi 0, %s24
    %s18 = sphi 0, %s16
    %s19 = sphi 0, %s17
    %s20 = sphi 0, %s18
    %s21 = sphi 0, %s19
    %s33 = sphi 0, %s35
    %s36 = sphi 0, %s33
    %s37 = sphi 0, %s36
    %s53 = sphi 0, %s37
    %s57 = sphi 0, %s57
    %s59 = sphi 0, %s57
    %s60 = sphi 0, %s59
    %s74 = sphi 0, %s60
    %s78 = sphi 0, %s78
    %s80 = sphi 0, %s78
    %s81 = sphi 0, %s80
    %s95 = sphi 0, %s81
    %s103 = sphi 0, %s105
    %s106 = sphi 0, %s103
    %s107 = sphi 0, %s106
    %s123 = sphi 0, %s107
  $region4: #{conv2d_tanh.1} parent=0 // loop_header_branch
    %12 = sbr.rel (%p10) target = $region8
  $region5: #{conv2d_tanh.1} parent=0 // loop_body
    %s14 = ssub.s32 %s9, 1
    %s15 = ssub.s32 %s9, 2
    %s22 = sadd.s32 1, %s17
    %p23 = scmp.ge.s32.totalorder %s22, 1
    %s24 = scalar_select %p23, 0, %s22
    %s25 = sadd.s32 1, %s16
    %s26 = scalar_select %p23, %s25, %s16
    %p27 = scmp.ge.s32.totalorder %s26, 2
    %s28 = scalar_select %p27, 0, %s26
    %s29 = ssub.s32 %s16, %s28
    %s30 = ssub.s32 %s17, %s24
    %s31 = sor.u32 %s29, %s30
    %p32 = scmp.eq.s32.totalorder %s31, 0
    %s34 = sadd.s32 %s33, 1
    %s35 = scalar_select %p32, %s33, %s34
    %p38 = pneg %p32
    %p39 = scmp.eq.s32.totalorder %s9, 1
    %p40 = por %p38, %p39
    %p41 = scmp.ne.s32.totalorder %s33, %s36
    %p42 = scmp.eq.s32.totalorder %s9, 0
    %p43 = por %p41, %p42
    %p44 = scmp.ne.s32.totalorder %s33, %s36
    %p45 = scmp.eq.s32.totalorder %s14, 1
    %p46 = por %p44, %p45
    %p47 = scmp.ne.s32.totalorder %s36, %s37
    %p48 = scmp.eq.s32.totalorder %s14, 0
    %p49 = por %p47, %p48
    %p50 = scmp.ne.s32.totalorder %s36, %s37
    %p51 = scmp.eq.s32.totalorder %s15, 1
    %p52 = por %p50, %p51
    %p54 = scmp.ne.s32.totalorder %s37, %s53
    %p55 = scmp.eq.s32.totalorder %s15, 0
    %p56 = por %p54, %p55
    %s58 = sadd.s32 %s57, 1
    %p61 = scmp.eq.s32.totalorder %s9, 1
    %p62 = scmp.ne.s32.totalorder %s57, %s59
    %p63 = scmp.eq.s32.totalorder %s9, 0
    %p64 = por %p62, %p63
    %p65 = scmp.ne.s32.totalorder %s57, %s59
    %p66 = scmp.eq.s32.totalorder %s14, 1
    %p67 = por %p65, %p66
    %p68 = scmp.ne.s32.totalorder %s59, %s60
    %p69 = scmp.eq.s32.totalorder %s14, 0
    %p70 = por %p68, %p69
    %p71 = scmp.ne.s32.totalorder %s59, %s60
    %p72 = scmp.eq.s32.totalorder %s15, 1
    %p73 = por %p71, %p72
    %p75 = scmp.ne.s32.totalorder %s60, %s74
    %p76 = scmp.eq.s32.totalorder %s15, 0
    %p77 = por %p75, %p76
    %s79 = sadd.s32 %s78, 1
    %p82 = scmp.eq.s32.totalorder %s9, 1
    %p83 = scmp.ne.s32.totalorder %s78, %s80
    %p84 = scmp.eq.s32.totalorder %s9, 0
    %p85 = por %p83, %p84
    %p86 = scmp.ne.s32.totalorder %s78, %s80
    %p87 = scmp.eq.s32.totalorder %s14, 1
    %p88 = por %p86, %p87
    %p89 = scmp.ne.s32.totalorder %s80, %s81
    %p90 = scmp.eq.s32.totalorder %s14, 0
    %p91 = por %p89, %p90
    %p92 = scmp.ne.s32.totalorder %s80, %s81
    %p93 = scmp.eq.s32.totalorder %s15, 1
    %p94 = por %p92, %p93
    %p96 = scmp.ne.s32.totalorder %s81, %s95
    %p97 = scmp.eq.s32.totalorder %s15, 0
    %p98 = por %p96, %p97
    %s99 = ssub.s32 %s16, %s28
    %s100 = ssub.s32 %s17, %s24
    %s101 = sor.u32 %s99, %s100
    %p102 = scmp.eq.s32.totalorder %s101, 0
    %s104 = sadd.s32 %s103, 1
    %s105 = scalar_select %p102, %s103, %s104
    %p108 = pneg %p102
    %p109 = scmp.eq.s32.totalorder %s9, 1
    %p110 = por %p108, %p109
    %p111 = scmp.ne.s32.totalorder %s103, %s106
    %p112 = scmp.eq.s32.totalorder %s9, 0
    %p113 = por %p111, %p112
    %p114 = scmp.ne.s32.totalorder %s103, %s106
    %p115 = scmp.eq.s32.totalorder %s14, 1
    %p116 = por %p114, %p115
    %p117 = scmp.ne.s32.totalorder %s106, %s107
    %p118 = scmp.eq.s32.totalorder %s14, 0
    %p119 = por %p117, %p118
    %p120 = scmp.ne.s32.totalorder %s106, %s107
    %p121 = scmp.eq.s32.totalorder %s15, 1
    %p122 = por %p120, %p121
    %p124 = scmp.ne.s32.totalorder %s107, %s123
    %p125 = scmp.eq.s32.totalorder %s15, 0
    %p126 = por %p124, %p125
    %p127 = scmp.le.s32.totalorder 1, %s9
    %p128 = scmp.lt.s32.totalorder %s9, 3
    %p129 = pnand %p127, %p128
    %p130 = pneg %p129
    // Predicated region
    $region9: #{conv2d_tanh.1} parent=5 // pred_check
      _
    $region10: #{conv2d_tanh.1} parent=5 // pred_check_branch
      %132 = sbr.rel (%p129) target = $region12
    $region11: #{conv2d_tanh.1} parent=5 // pred_region
      %s133 = ssub.s32 %s9, 1
      // Predicated region
      $region13: #{conv2d_tanh.1} parent=11 // pred_check
        %p134 = pneg %p70
      $region14: #{conv2d_tanh.1} parent=11 // pred_check_branch
        %136 = sbr.rel (%p134) target = $region16
      $region15: #{conv2d_tanh.1} parent=11 // pred_region
        _
      $region16: #{conv2d_tanh.1} parent=11 // pred_fallthru
        _
      // Predicated region
      $region17: #{conv2d_tanh.1} parent=11 // pred_check
        %p137 = pneg %p91
      $region18: #{conv2d_tanh.1} parent=11 // pred_check_branch
        %139 = sbr.rel (%p137) target = $region20
      $region19: #{conv2d_tanh.1} parent=11 // pred_region
        _
      $region20: #{conv2d_tanh.1} parent=11 // pred_fallthru
        _
    $region12: #{conv2d_tanh.1} parent=5 // pred_fallthru
      _
    %p140 = scmp.lt.s32.totalorder %s9, 2
    // Predicated region
    $region21: #{conv2d_tanh.1} parent=5 // pred_check
      %p141 = pneg %p140
    $region22: #{conv2d_tanh.1} parent=5 // pred_check_branch
      %143 = sbr.rel (%p141) target = $region24
    $region23: #{conv2d_tanh.1} parent=5 // pred_region
      // Predicated region
      $region25: #{conv2d_tanh.1} parent=23 // pred_check
        %p144 = pneg %p43
      $region26: #{conv2d_tanh.1} parent=23 // pred_check_branch
        %146 = sbr.rel (%p144) target = $region28
      $region27: #{conv2d_tanh.1} parent=23 // pred_region
        %s147 = smul.u32 2, %s17
        %p148 = scmp.lt.s32.totalorder %s16, 1
        %s149 = scalar_select %p148, %s16, 1
        %p150 = scmp.lt.s32.totalorder %s147, 1
        %s151 = scalar_select %p150, %s147, 1
        %s152 = smul.addr %s149, 10
        %s153 = sadd.s32 %s151, %s152
        %s154 = smul.addr %s153, 4
        %s155 = scalar_lea.vmem %s0, %s154
        %s156 = smul.u32 2, %s17
      $region28: #{conv2d_tanh.1} parent=23 // pred_fallthru
        _
    $region24: #{conv2d_tanh.1} parent=5 // pred_fallthru
      _
    %p157 = scmp.le.s32.totalorder 1, %s9
    %p158 = scmp.lt.s32.totalorder %s9, 3
    %p159 = pnand %p157, %p158
    %p160 = pneg %p159
    // Predicated region
    $region29: #{conv2d_tanh.1} parent=5 // pred_check
      _
    $region30: #{conv2d_tanh.1} parent=5 // pred_check_branch
      %162 = sbr.rel (%p159) target = $region32
    $region31: #{conv2d_tanh.1} parent=5 // pred_region
      %s163 = ssub.s32 %s9, 1
      %s164 = smul.u32 2, %s19
      %p165 = scmp.lt.s32.totalorder %s18, 1
      %s166 = scalar_select %p165, %s18, 1
      %p167 = scmp.lt.s32.totalorder %s164, 1
      %s168 = scalar_select %p167, %s164, 1
      %s169 = smul.addr %s166, 10
      %s170 = sadd.s32 %s168, %s169
      %s171 = smul.addr %s170, 4
      %s172 = scalar_lea.vmem %s0, %s171
      %p173 = pneg %p49
      %p174 = pneg %p46
      %p175 = pneg %p70
      %p176 = pneg %p67
      %p177 = pneg %p91
      %p178 = pneg %p88
      %p179 = pneg %p119
      %p180 = pneg %p116
      %s181 = smul.u32 2, %s19
      %p182 = scmp.lt.s32.totalorder %s18, 1
      %s183 = scalar_select %p182, %s18, 1
      %p184 = scmp.lt.s32.totalorder %s181, 1
      %s185 = scalar_select %p184, %s181, 1
      %s186 = smul.addr %s183, 2
      %s187 = sadd.s32 %s185, %s186
      %s188 = smul.addr %s187, 8
      %s189 = scalar_lea.vmem %s3, %s188
      %s190 = smul.u32 2, %s19
      %p191 = scmp.lt.s32.totalorder %s18, 1
      %s192 = scalar_select %p191, %s18, 1
      %p193 = scmp.lt.s32.totalorder %s190, 1
      %s194 = scalar_select %p193, %s190, 1
      %s195 = smul.addr %s192, 10
      %s196 = sadd.s32 %s194, %s195
      %s197 = smul.addr %s196, 4
      %s198 = scalar_lea.vmem %s0, %s197
      %s199 = smul.u32 2, %s19
      %s200 = smul.u32 2, %s19
      %p201 = scmp.lt.s32.totalorder %s18, 1
      %s202 = scalar_select %p201, %s18, 1
      %p203 = scmp.lt.s32.totalorder %s200, 1
      %s204 = scalar_select %p203, %s200, 1
      %s205 = smul.addr %s202, 2
      %s206 = sadd.s32 %s204, %s205
      %s207 = smul.addr %s206, 8
      %s208 = scalar_lea.vmem %s3, %s207
      %s209 = smul.u32 2, %s19
      %v211 = vld [vmem:[%s1] sm:$0xf]
      %v212 = vld [vmem:[%s198] sm:$0xff]
      %v213 = vld [vmem:[%s198 + $0x8] sm:$0xff]
      %v214 = vld [vmem:[%s198 + $0x10] sm:$0xff]
      %v215 = vld [vmem:[%s198 + $0x18] sm:$0xff]
      %v216 = vld [vmem:[%s198 + $0x20] sm:$0x33]
      %v217 = vld [vmem:[%s2] sm:$0xff]
      %219 = vset.pattern.permute.xlu0 0
      %220 = vperm.xlu0 %219, %v217
      %v221 = vpop.permute.xlu0 %220
      %v228 = vunpack.c.l.b16 %v212
      %v229 = vunpack.c.h.b16 %v212
      %v230 = vunpack.c.l.b16 %v213
      %v231 = vunpack.c.h.b16 %v213
      %v232 = vunpack.c.l.b16 %v214
      %v233 = vunpack.c.h.b16 %v214
      %v234 = vunpack.c.l.b16 %v215
      %v235 = vunpack.c.h.b16 %v215
      %v236 = vunpack.c.l.b16 %v216
      %v237 = vunpack.c.h.b16 %v216
      %v238 = vpack.c.b16 %v230, %v228
      %v239 = vpack.c.b16 %v231, %v229
      %v240 = vpack.c.b16 %v234, %v232
      %v241 = vpack.c.b16 %v235, %v233
      %v242 = vpack.c.b16 %v236, %v236
      %v243 = vpack.c.b16 %v237, %v237
      %vm248 = vcmask 293888
      %v250 = vsel %vm248, %v211, 0
      %vm252 = vcmask 1041408
      %v254 = vsel %vm252, %v242, 0
      %v257 = vsel %vm252, %v243, 0
      %259 = vmatpush.bf16.msra.mxu0 0
      %260 = vmatpush.bf16.msra.mxu0 0
      %261 = vmatpush.bf16.msra.mxu0 0
      %262 = vmatpush.bf16.msra.mxu0 0
      %263 = vmatpush.bf16.msra.mxu0 0
      %264 = vmatpush.bf16.msra.mxu0 %v254
      %265 = vmatpush.bf16.msra.mxu0 %v240
      %266 = vmatpush.bf16.msra.mxu0 %v238
      %267 = vmatmul.bf16.gmra.mxu0 %v250
      %v268 = vpop.f32.mrf.mxu0
      %v269 = vadd.f32 %v221, %v268
      %v270 = vpop.f32.mrf.mxu0
      %271 = vdwg.mxu0
      %272 = vmatpush.bf16.msra.mxu0 0
      %273 = vmatpush.bf16.msra.mxu0 0
      %274 = vmatpush.bf16.msra.mxu0 0
      %275 = vmatpush.bf16.msra.mxu0 0
      %276 = vmatpush.bf16.msra.mxu0 0
      %277 = vmatpush.bf16.msra.mxu0 %v257
      %278 = vmatpush.bf16.msra.mxu0 %v241
      %279 = vmatpush.bf16.msra.mxu0 %v239
      %280 = vmatmul.bf16.gmra.mxu0 %v250
      %v281 = vpop.f32.mrf.mxu0
      %v282 = vadd.f32 %v221, %v281
      %v283 = vpop.f32.mrf.mxu0
      %284 = vdwg.mxu0
      %v285 = vtanh.pop %v269
      %v286 = vtanh.pop %v282
      %287 = vst [vmem:[%s208] sm:$0xff] %v285
      %288 = vst [vmem:[%s208 + $0x8] sm:$0xff] %v286
      %s289 = smul.u32 2, %s19
      %p290 = scmp.lt.s32.totalorder %s18, 1
      %s291 = scalar_select %p290, %s18, 1
      %p292 = scmp.lt.s32.totalorder %s289, 1
      %s293 = scalar_select %p292, %s289, 1
      %s294 = smul.addr %s291, 2
      %s295 = sadd.s32 %s293, %s294
      %s296 = smul.addr %s295, 8
      %s297 = scalar_lea.vmem %s3, %s296
      // Predicated region
      $region33: #{conv2d_tanh.1} parent=31 // pred_check
        %p298 = pneg %p116
      $region34: #{conv2d_tanh.1} parent=31 // pred_check_branch
        %300 = sbr.rel (%p298) target = $region36
      $region35: #{conv2d_tanh.1} parent=31 // pred_region
        %s301 = smul.u32 2, %s19
      $region36: #{conv2d_tanh.1} parent=31 // pred_fallthru
        _
    $region32: #{conv2d_tanh.1} parent=5 // pred_fallthru
      _
    %p302 = scmp.le.s32.totalorder 2, %s9
    // Predicated region
    $region37: #{conv2d_tanh.1} parent=5 // pred_check
      %p303 = pneg %p302
    $region38: #{conv2d_tanh.1} parent=5 // pred_check_branch
      %305 = sbr.rel (%p303) target = $region40
    $region39: #{conv2d_tanh.1} parent=5 // pred_region
      %s306 = ssub.s32 %s9, 2
      // Predicated region
      $region41: #{conv2d_tanh.1} parent=39 // pred_check
        %p307 = pneg %p122
      $region42: #{conv2d_tanh.1} parent=39 // pred_check_branch
        %309 = sbr.rel (%p307) target = $region44
      $region43: #{conv2d_tanh.1} parent=39 // pred_region
        %s310 = smul.u32 2, %s21
        %p311 = scmp.lt.s32.totalorder %s20, 1
        %s312 = scalar_select %p311, %s20, 1
        %p313 = scmp.lt.s32.totalorder %s310, 1
        %s314 = scalar_select %p313, %s310, 1
        %s315 = smul.addr %s312, 2
        %s316 = sadd.s32 %s314, %s315
        %s317 = smul.addr %s316, 8
        %s318 = scalar_lea.vmem %s3, %s317
      $region44: #{conv2d_tanh.1} parent=39 // pred_fallthru
        _
    $region40: #{conv2d_tanh.1} parent=5 // pred_fallthru
      _
  $region6: #{conv2d_tanh.1} parent=0 // loop_footer
    %s13 = sadd.s32 1, %s9
  $region7: #{conv2d_tanh.1} parent=0 // loop_footer_branch
    %8 = sbr.rel target = $region3
  $region8: #{conv2d_tanh.1} parent=0 // loop_exit
    _

</llo_original>
